<compile_context>
chip_gen: v7x
topology: tpu7x:2x2x1
jax: 0.10.0
libtpu: 0.0.40
codegen_flags: <defaults>
</compile_context>

<pallas_src>
import functools

import jax
import jax.numpy as jnp
from jax.experimental import pallas as pl
from jax.experimental.pallas import tpu as pltpu


_SMALL_K_MAX = 8                         # above this, switch to threshold select


def _round_up(x: int, m: int) -> int:
    return -(-x // m) * m


def _vmem_budgets():
    """(scoped vmem limit, target working-set bytes), derived from the chip."""
    try:
        cap = int(pltpu.get_tpu_info().vmem_capacity_bytes)
    except Exception:
        cap = 64 * 1024 * 1024           # conservative: v7x per-TensorCore VMEM
    limit = min(cap // 2, 48 * 1024 * 1024)          # v7x: 32 MiB, v5e/v6e: 48 MiB
    limit = max(limit, 16 * 1024 * 1024)
    workset = (limit * 2) // 3                        # v7x: ~21 MiB, v5e/v6e: 32 MiB
    return limit, workset


def _choose_tile_n(n: int, d: int, elem_bytes: int, pack: int, workset_bytes: int) -> int:
    # Per tile row: 2 inputs x 2 auto-pipeline buffers at native dtype, plus the in-kernel
    # f32 squared-error array and roughly one full-width temporary.
    bytes_per_row = d * (2 * 2 * elem_bytes + 8)
    cap = workset_bytes // max(bytes_per_row, 1)
    cap = max(pack, (cap // pack) * pack)
    if n >= 2 * pack:
        # Megacore: make sure the grid has >= 2 steps so both TensorCores get work (v7x).
        cap = min(cap, _round_up(-(-n // 2), pack))
    return n if n <= cap else cap


def _mse_ohem_kernel(pred_ref, tgt_ref, psum_ref, *, k, n_rows, tile_n, d):
    i = pl.program_id(0)
    p = pred_ref[...].astype(jnp.float32)
    t = tgt_ref[...].astype(jnp.float32)
    se = (p - t) * (p - t)                                    # (tile_n, d), always >= 0

    # Mask for rows that fall outside the true N (padding of the last tile).  All
    # reductions before this mask are strictly per-row (axis=-1), so padded garbage
    # can never contaminate valid rows.
    row_ids = i * tile_n + jax.lax.broadcasted_iota(jnp.int32, (tile_n, 1), 0)
    row_mask = row_ids < n_rows

    if k <= _SMALL_K_MAX:
        # --- small k: k-step extract-min with a per-row accumulator (scalar sum hoisted).
        col_iota = jax.lax.broadcasted_iota(jnp.int32, (1, d), 1)

        def body(_, carry):
            se_cur, acc = carry
            rowmin = jnp.min(se_cur, axis=-1, keepdims=True)              # (tile_n, 1)
            # First occurrence of the row minimum: exactly one element is knocked out,
            # so tied values are counted individually (same as torch.topk).
            min_idx = jnp.min(
                jnp.where(se_cur == rowmin, col_iota, jnp.int32(d)),
                axis=-1, keepdims=True)
            acc = acc + rowmin
            se_cur = jnp.where(col_iota == min_idx, jnp.float32(jnp.inf), se_cur)
            return se_cur, acc

        acc0 = jnp.zeros((tile_n, 1), jnp.float32)
        _, per_row = jax.lax.fori_loop(0, k, body, (se, acc0), unroll=min(k, 8))
    else:
        # --- large k: exact threshold select via bisection on the k-th smallest value's
        # f32 bit pattern.  No (tile_n, d) int32 copy of se: lo/hi/mid are (tile_n, 1)
        # int32 columns and compares happen in the float domain, which is order-equivalent
        # because se >= 0 and every mid lies in [0, +inf bits] (never a NaN pattern).
        lo0 = jnp.zeros((tile_n, 1), jnp.int32)
        hi0 = jnp.full((tile_n, 1), jnp.int32(0x7F800000))    # +inf bit pattern

        def search(_, carry):
            lo, hi = carry
            mid = lo + (hi - lo) // 2
            mid_f = pltpu.bitcast(mid, jnp.float32)           # (tile_n, 1), never NaN
            cnt = jnp.sum((se <= mid_f).astype(jnp.int32), axis=-1, keepdims=True)
            take_hi = cnt >= k
            hi = jnp.where(take_hi, mid, hi)
            lo = jnp.where(take_hi, lo, mid + 1)
            return lo, hi

        # 31 iterations narrow [0, 0x7F800000] down to the k-th smallest value's bits.
        t_bits, _ = jax.lax.fori_loop(0, 31, search, (lo0, hi0), unroll=4)
        t_val = pltpu.bitcast(t_bits, jnp.float32)            # (tile_n, 1)

        less = se < t_val
        c_less = jnp.sum(less.astype(jnp.int32), axis=-1, keepdims=True)
        sum_less = jnp.sum(jnp.where(less, se, jnp.float32(0.0)),
                           axis=-1, keepdims=True)
        # sum of k smallest = sum(strictly below threshold) + (k - count_below) * threshold
        per_row = sum_less + (k - c_less).astype(jnp.float32) * t_val

    per_row = jnp.where(row_mask, per_row, jnp.float32(0.0))
    tile_sum = jnp.sum(per_row)                               # one cross-sublane reduce/tile
    psum_ref[...] = jnp.broadcast_to(tile_sum, psum_ref.shape).astype(jnp.float32)


def mse_ohem_loss(output, target, percent: float = 0.5):
    assert output.shape == target.shape and output.ndim == 2
    n, d = output.shape
    k = int(percent * n)
    assert k > 0, "k must be > 0 (PyTorch mean over 0 elements would be NaN)"
    assert k <= d, "topk along the last dim requires k <= D (PyTorch would raise)"

    elem_bytes = jnp.dtype(output.dtype).itemsize
    pack = max(8, 32 // elem_bytes)      # sublane packing: f32->8, bf16->16, int8->32
    vmem_limit, workset = _vmem_budgets()

    # TODO(synk): huge-D inputs (a single minimal row-tile exceeding the VMEM budget)
    # would need a D-chunked two-level selection; assert instead of mis-compiling.
    assert pack * d * (2 * 2 * elem_bytes + 8) <= workset, \
        "D too large for a single row-tile in VMEM"

    tile_n = _choose_tile_n(n, d, elem_bytes, pack, workset)
    num_tiles = pl.cdiv(n, tile_n)

    kernel = functools.partial(_mse_ohem_kernel, k=k, n_rows=n, tile_n=tile_n, d=d)
    psums = pl.pallas_call(
        kernel,
        out_shape=jax.ShapeDtypeStruct((num_tiles, 8, 128), jnp.float32),
        grid_spec=pltpu.PrefetchScalarGridSpec(
            num_scalar_prefetch=0,
            grid=(num_tiles,),
            in_specs=[
                pl.BlockSpec((tile_n, d), lambda i: (i, 0)),
                pl.BlockSpec((tile_n, d), lambda i: (i, 0)),
            ],
            out_specs=pl.BlockSpec((1, 8, 128), lambda i: (i, 0, 0)),
        ),
        compiler_params=pltpu.CompilerParams(
            dimension_semantics=("parallel",),
            vmem_limit_bytes=vmem_limit,
        ),
    )(output, target)
    # Final mean over the true N*k selected elements (padded rows already masked to 0).
    return jnp.sum(psums[:, 0, 0]) / jnp.float32(n * k)


def _reference(output, target, percent: float = 0.5):
    """Pure-JAX reference mirroring the PyTorch module."""
    se = (output.astype(jnp.float32) - target.astype(jnp.float32)) ** 2
    k = int(percent * output.shape[0])
    smallest = -jax.lax.top_k(-se, k)[0]                      # k smallest along last dim
    return smallest.mean()


if __name__ == "__main__":
    key = jax.random.PRNGKey(0)
    k1, k2, k3, k4, k5, k6 = jax.random.split(key, 6)

    # Case 1: tiny shape -> k = 4 exercises the small-k extract-min path (single tile).
    out_a = jax.random.normal(k1, (8, 128), dtype=jnp.float32)
    tgt_a = jax.random.normal(k2, (8, 128), dtype=jnp.float32)
    loss_a = jax.block_until_ready(mse_ohem_loss(out_a, tgt_a, percent=0.5))
    ref_a = _reference(out_a, tgt_a, percent=0.5)
    assert jnp.allclose(loss_a, ref_a, rtol=1e-5, atol=1e-6), (loss_a, ref_a)

    # Case 2: N = 60 -> k = 30 exercises the threshold-select path, the 2-tile megacore
    # split (tile_n = 32), and masking of the padded rows in the last tile.
    out_b = jax.random.normal(k3, (60, 256), dtype=jnp.float32)
    tgt_b = jax.random.normal(k4, (60, 256), dtype=jnp.float32)
    loss_b = jax.block_until_ready(mse_ohem_loss(out_b, tgt_b, percent=0.5))
    ref_b = _reference(out_b, tgt_b, percent=0.5)
    assert jnp.allclose(loss_b, ref_b, rtol=1e-5, atol=1e-6), (loss_b, ref_b)

    # Case 3: bf16 inputs (halved HBM traffic; kernel upcasts internally) -> k = 16,
    # threshold path, bf16-packed 16-row tiles.
    out_c = jax.random.normal(k5, (32, 128), dtype=jnp.bfloat16)
    tgt_c = jax.random.normal(k6, (32, 128), dtype=jnp.bfloat16)
    loss_c = jax.block_until_ready(mse_ohem_loss(out_c, tgt_c, percent=0.5))
    ref_c = _reference(out_c, tgt_c, percent=0.5)
    assert jnp.allclose(loss_c, ref_c, rtol=1e-4, atol=1e-5), (loss_c, ref_c)

    print("KERNEL_OK")
</pallas_src>

<mosaic_0001>
module attributes {stable_mosaic.version = 11 : i64} {
  func.func @_mse_ohem_kernel(%arg0: i32, %arg1: memref<8x128xf32, #tpu.memory_space<vmem>>, %arg2: memref<8x128xf32, #tpu.memory_space<vmem>>, %arg3: memref<1x8x128xf32, #tpu.memory_space<vmem>>) attributes {dimension_semantics = [#tpu.dimension_semantics<parallel>], iteration_bounds = array<i64: 1>, scalar_prefetch = 0 : i64, scratch_operands = 0 : i64, tpu.core_type = #tpu.core_type<tc>, window_params = [{transform_indices = @transform_0, window_bounds = array<i64: 8, 128>}, {transform_indices = @transform_1, window_bounds = array<i64: 8, 128>}, {transform_indices = @transform_2, window_bounds = array<i64: 1, 8, 128>}]} {
    %c0 = arith.constant 0 : index
    %c0_0 = arith.constant 0 : index
    %0 = vector.load %arg1[%c0, %c0_0] : memref<8x128xf32, #tpu.memory_space<vmem>>, vector<8x128xf32>
    %c0_1 = arith.constant 0 : index
    %c0_2 = arith.constant 0 : index
    %1 = vector.load %arg2[%c0_1, %c0_2] : memref<8x128xf32, #tpu.memory_space<vmem>>, vector<8x128xf32>
    %2 = arith.subf %0, %1 : vector<8x128xf32>
    %3 = arith.subf %0, %1 : vector<8x128xf32>
    %4 = arith.mulf %2, %3 : vector<8x128xf32>
    %c8_i32 = arith.constant 8 : i32
    %5 = arith.muli %arg0, %c8_i32 : i32
    %6 = tpu.iota {dimensions = array<i32: 0>} : vector<8x1xi32>
    %7 = vector.broadcast %5 : i32 to vector<8x1xi32>
    %8 = arith.addi %7, %6 : vector<8x1xi32>
    %c8_i32_3 = arith.constant 8 : i32
    %9 = vector.broadcast %c8_i32_3 : i32 to vector<8x1xi32>
    %10 = arith.cmpi slt, %8, %9 : vector<8x1xi32>
    %11 = tpu.iota {dimensions = array<i32: 1>} : vector<1x128xi32>
    %cst = arith.constant 0.000000e+00 : f32
    %12 = vector.broadcast %cst : f32 to vector<8x1xf32>
    %c0_i32 = arith.constant 0 : i32
    %cst_4 = arith.constant dense<0x7F800000> : vector<8xf32>
    %13 = vector.multi_reduction <minimumf>, %4, %cst_4 [1] : vector<8x128xf32> to vector<8xf32>
    %14 = vector.shape_cast %13 : vector<8xf32> to vector<8x1xf32>
    %15 = vector.broadcast %14 : vector<8x1xf32> to vector<8x128xf32>
    %16 = arith.cmpf oeq, %4, %15 : vector<8x128xf32>
    %c128_i32 = arith.constant 128 : i32
    %17 = vector.shape_cast %11 : vector<1x128xi32> to vector<1x128xi32>
    %18 = vector.broadcast %17 : vector<1x128xi32> to vector<8x128xi32>
    %19 = vector.broadcast %c128_i32 : i32 to vector<8x128xi32>
    %20 = arith.select %16, %18, %19 : vector<8x128xi1>, vector<8x128xi32>
    %cst_5 = arith.constant dense<2147483647> : vector<8xi32>
    %21 = vector.multi_reduction <minsi>, %20, %cst_5 [1] : vector<8x128xi32> to vector<8xi32>
    %22 = vector.shape_cast %21 : vector<8xi32> to vector<8x1xi32>
    %23 = arith.addf %12, %14 : vector<8x1xf32>
    %24 = vector.broadcast %11 : vector<1x128xi32> to vector<8x128xi32>
    %25 = vector.broadcast %22 : vector<8x1xi32> to vector<8x128xi32>
    %26 = arith.cmpi eq, %24, %25 : vector<8x128xi32>
    %cst_6 = arith.constant 0x7F800000 : f32
    %27 = vector.broadcast %cst_6 : f32 to vector<8x128xf32>
    %28 = arith.select %26, %27, %4 : vector<8x128xi1>, vector<8x128xf32>
    %c1_i32 = arith.constant 1 : i32
    %cst_7 = arith.constant dense<0x7F800000> : vector<8xf32>
    %29 = vector.multi_reduction <minimumf>, %28, %cst_7 [1] : vector<8x128xf32> to vector<8xf32>
    %30 = vector.shape_cast %29 : vector<8xf32> to vector<8x1xf32>
    %31 = vector.broadcast %30 : vector<8x1xf32> to vector<8x128xf32>
    %32 = arith.cmpf oeq, %28, %31 : vector<8x128xf32>
    %c128_i32_8 = arith.constant 128 : i32
    %33 = vector.shape_cast %11 : vector<1x128xi32> to vector<1x128xi32>
    %34 = vector.broadcast %33 : vector<1x128xi32> to vector<8x128xi32>
    %35 = vector.broadcast %c128_i32_8 : i32 to vector<8x128xi32>
    %36 = arith.select %32, %34, %35 : vector<8x128xi1>, vector<8x128xi32>
    %cst_9 = arith.constant dense<2147483647> : vector<8xi32>
    %37 = vector.multi_reduction <minsi>, %36, %cst_9 [1] : vector<8x128xi32> to vector<8xi32>
    %38 = vector.shape_cast %37 : vector<8xi32> to vector<8x1xi32>
    %39 = arith.addf %23, %30 : vector<8x1xf32>
    %40 = vector.broadcast %11 : vector<1x128xi32> to vector<8x128xi32>
    %41 = vector.broadcast %38 : vector<8x1xi32> to vector<8x128xi32>
    %42 = arith.cmpi eq, %40, %41 : vector<8x128xi32>
    %cst_10 = arith.constant 0x7F800000 : f32
    %43 = vector.broadcast %cst_10 : f32 to vector<8x128xf32>
    %44 = arith.select %42, %43, %28 : vector<8x128xi1>, vector<8x128xf32>
    %c2_i32 = arith.constant 2 : i32
    %cst_11 = arith.constant dense<0x7F800000> : vector<8xf32>
    %45 = vector.multi_reduction <minimumf>, %44, %cst_11 [1] : vector<8x128xf32> to vector<8xf32>
    %46 = vector.shape_cast %45 : vector<8xf32> to vector<8x1xf32>
    %47 = vector.broadcast %46 : vector<8x1xf32> to vector<8x128xf32>
    %48 = arith.cmpf oeq, %44, %47 : vector<8x128xf32>
    %c128_i32_12 = arith.constant 128 : i32
    %49 = vector.shape_cast %11 : vector<1x128xi32> to vector<1x128xi32>
    %50 = vector.broadcast %49 : vector<1x128xi32> to vector<8x128xi32>
    %51 = vector.broadcast %c128_i32_12 : i32 to vector<8x128xi32>
    %52 = arith.select %48, %50, %51 : vector<8x128xi1>, vector<8x128xi32>
    %cst_13 = arith.constant dense<2147483647> : vector<8xi32>
    %53 = vector.multi_reduction <minsi>, %52, %cst_13 [1] : vector<8x128xi32> to vector<8xi32>
    %54 = vector.shape_cast %53 : vector<8xi32> to vector<8x1xi32>
    %55 = arith.addf %39, %46 : vector<8x1xf32>
    %56 = vector.broadcast %11 : vector<1x128xi32> to vector<8x128xi32>
    %57 = vector.broadcast %54 : vector<8x1xi32> to vector<8x128xi32>
    %58 = arith.cmpi eq, %56, %57 : vector<8x128xi32>
    %cst_14 = arith.constant 0x7F800000 : f32
    %59 = vector.broadcast %cst_14 : f32 to vector<8x128xf32>
    %60 = arith.select %58, %59, %44 : vector<8x128xi1>, vector<8x128xf32>
    %c3_i32 = arith.constant 3 : i32
    %cst_15 = arith.constant dense<0x7F800000> : vector<8xf32>
    %61 = vector.multi_reduction <minimumf>, %60, %cst_15 [1] : vector<8x128xf32> to vector<8xf32>
    %62 = vector.shape_cast %61 : vector<8xf32> to vector<8x1xf32>
    %63 = vector.broadcast %62 : vector<8x1xf32> to vector<8x128xf32>
    %64 = arith.cmpf oeq, %60, %63 : vector<8x128xf32>
    %c128_i32_16 = arith.constant 128 : i32
    %65 = vector.shape_cast %11 : vector<1x128xi32> to vector<1x128xi32>
    %66 = vector.broadcast %65 : vector<1x128xi32> to vector<8x128xi32>
    %67 = vector.broadcast %c128_i32_16 : i32 to vector<8x128xi32>
    %68 = arith.select %64, %66, %67 : vector<8x128xi1>, vector<8x128xi32>
    %cst_17 = arith.constant dense<2147483647> : vector<8xi32>
    %69 = vector.multi_reduction <minsi>, %68, %cst_17 [1] : vector<8x128xi32> to vector<8xi32>
    %70 = vector.shape_cast %69 : vector<8xi32> to vector<8x1xi32>
    %71 = arith.addf %55, %62 : vector<8x1xf32>
    %72 = vector.broadcast %11 : vector<1x128xi32> to vector<8x128xi32>
    %73 = vector.broadcast %70 : vector<8x1xi32> to vector<8x128xi32>
    %74 = arith.cmpi eq, %72, %73 : vector<8x128xi32>
    %cst_18 = arith.constant 0x7F800000 : f32
    %75 = vector.broadcast %cst_18 : f32 to vector<8x128xf32>
    %76 = arith.select %74, %75, %60 : vector<8x128xi1>, vector<8x128xf32>
    %cst_19 = arith.constant 0.000000e+00 : f32
    %77 = vector.broadcast %cst_19 : f32 to vector<8x1xf32>
    %78 = arith.select %10, %71, %77 : vector<8x1xi1>, vector<8x1xf32>
    %79 = vector.shape_cast %78 : vector<8x1xf32> to vector<1x8x1xf32>
    %cst_20 = arith.constant dense<0.000000e+00> : vector<1xf32>
    %80 = vector.multi_reduction <add>, %79, %cst_20 [1, 2] : vector<1x8x1xf32> to vector<1xf32>
    %81 = vector.shape_cast %80 : vector<1xf32> to vector<1x1x1xf32>
    %82 = vector.extract %81[0, 0, 0] : f32 from vector<1x1x1xf32>
    %83 = vector.broadcast %82 : f32 to vector<1x8x128xf32>
    %c0_21 = arith.constant 0 : index
    %c0_22 = arith.constant 0 : index
    %c0_23 = arith.constant 0 : index
    %84 = vector.load %arg3[%c0_21, %c0_22, %c0_23] : memref<1x8x128xf32, #tpu.memory_space<vmem>>, vector<1x8x128xf32>
    tpu.vector_store %arg3[%c0_21, %c0_22, %c0_23], %83 {strides = array<i32>} : memref<1x8x128xf32, #tpu.memory_space<vmem>>, vector<1x8x128xf32>,
    return
  }
  func.func @transform_0(%arg0: i32) -> (i32, i32) {
    %c0_i32 = arith.constant 0 : i32
    %c0_i32_0 = arith.constant 0 : i32
    return %arg0, %c0_i32 : i32, i32
  }
  func.func @transform_1(%arg0: i32) -> (i32, i32) {
    %c0_i32 = arith.constant 0 : i32
    %c0_i32_0 = arith.constant 0 : i32
    return %arg0, %c0_i32 : i32, i32
  }
  func.func @transform_2(%arg0: i32) -> (i32, i32, i32) {
    %c0_i32 = arith.constant 0 : i32
    %c0_i32_0 = arith.constant 0 : i32
    %c0_i32_1 = arith.constant 0 : i32
    return %arg0, %c0_i32, %c0_i32_0 : i32, i32, i32
  }
}

</mosaic_0001>

<llo_original>
// kernel: tpu_custom_call.1
$region0: #{tpu_custom_call.1}
  #allocation0 [shape = 'u32[]', space=smem, size = 0x4, offset = 0x4, fixed_abs, tag = 'smem constant byte address 0x4 - core index']
  #allocation1 [shape = 'u32[144,128]{1,0:T(1,128)}', space=vmem, size = 0x12000, scoped, tag = 'internal scratch']
  %s0 = inlined_call_operand.hbm [shape: f32[8,128], index: 0, kind: input, shape index: {}]
  %s1 = inlined_call_operand.hbm [shape: f32[8,128], index: 1, kind: input, shape index: {}]
  %s2 = inlined_call_operand.hbm [shape: f32[1,8,128], index: 2, kind: output, shape index: {}]
  %s3 = sld [smem:[#allocation0]]
  $region26: #{tpu_custom_call.1} parent=0
    _
  %s5 = ssub.s32 1, %s3
  %s6 = scalar_select 0, %s5, %s3
  $region1: #{tpu_custom_call.1} parent=0
    #allocation2 [shape = 'u8[4096]{0}', space=vmem, size = 0x1000, scoped, tag = 'input window, operand 0, single buffered']
    #allocation3 [shape = 's32[1]{0}', space=sflag, size = 0x4, scoped, tag = 'scoped memory for tpu_custom_call.1']
    #allocation4 [shape = 's32[1]{0}', space=sflag, size = 0x4, scoped, tag = 'scoped memory for tpu_custom_call.1']
    #allocation5 [shape = 'u8[4096]{0}', space=vmem, size = 0x1000, scoped, tag = 'input window, operand 1, single buffered']
    #allocation6 [shape = 's32[1]{0}', space=sflag, size = 0x4, scoped, tag = 'scoped memory for tpu_custom_call.1']
    #allocation7 [shape = 'u8[4096]{0}', space=vmem, size = 0x1000, scoped, tag = 'output window, operand 0, single buffered']
    %7 = vsyncpa [#allocation3], 0
    %8 = vsyncpa [#allocation6], 0
    %9 = vsyncpa [#allocation4], 0
    // Predicated region
    $region2: #{tpu_custom_call.1} parent=1 // pred_check
      _
    $region3: #{tpu_custom_call.1} parent=1 // pred_check_branch
      %11 = sbr.rel (0) target = $region5
    $region4: #{tpu_custom_call.1} parent=1 // pred_region
      %s13 = ssub.s32 128, 128
      %14 = vsyncadd [#allocation3], %s13
      %s16 = sshll.u32 [#allocation2], 4
      %s17 = int_to_ptr.vmem [resolvable:$true] %s16
      %19 = dma.hbm_to_vmem [thread:$0]  %s0, 128, %s17, [#allocation3]
    $region5: #{tpu_custom_call.1} parent=1 // pred_fallthru
      _
    // Predicated region
    $region6: #{tpu_custom_call.1} parent=1 // pred_check
      _
    $region7: #{tpu_custom_call.1} parent=1 // pred_check_branch
      %21 = sbr.rel (0) target = $region9
    $region8: #{tpu_custom_call.1} parent=1 // pred_region
      %s23 = ssub.s32 128, 128
      %24 = vsyncadd [#allocation6], %s23
      %s26 = sshll.u32 [#allocation5], 4
      %s27 = int_to_ptr.vmem [resolvable:$true] %s26
      %29 = dma.hbm_to_vmem [thread:$0]  %s1, 128, %s27, [#allocation6]
    $region9: #{tpu_custom_call.1} parent=1 // pred_fallthru
      _
    // Predicated region
    $region10: #{tpu_custom_call.1} parent=1 // pred_check
      _
    $region11: #{tpu_custom_call.1} parent=1 // pred_check_branch
      %31 = sbr.rel (0) target = $region13
    $region12: #{tpu_custom_call.1} parent=1 // pred_region
      %32 = dma.done [#allocation3], 128
    $region13: #{tpu_custom_call.1} parent=1 // pred_fallthru
      _
    // Predicated region
    $region14: #{tpu_custom_call.1} parent=1 // pred_check
      _
    $region15: #{tpu_custom_call.1} parent=1 // pred_check_branch
      %34 = sbr.rel (0) target = $region17
    $region16: #{tpu_custom_call.1} parent=1 // pred_region
      %35 = dma.done [#allocation6], 128
    $region17: #{tpu_custom_call.1} parent=1 // pred_fallthru
      _
    %v36 = vld [vmem:[#allocation2] sm:$0xff]
    %v37 = vld [vmem:[#allocation5] sm:$0xff]
    %v38 = vsub.f32 %v36, %v37
    %v39 = vmul.f32 %v38, %v38
    %s40 = smul.u32 0, 8
    %v41 = vlaneseq
    %v42 = vshrl.u32 %v41, 7
    %v43 = vstv %s40
    %v44 = vadd.s32 %v43, %v42
    %vm45 = vcmp.lt.s32.totalorder %v44, 8
    %v46 = vlaneseq
    %v47 = vand.u32 %v46, 127
    %48 = vmin.xlane.f32.xlu0 %v39
    %v49 = vpop.xlane.xlu0 %48
    %vm50 = vcmp.eq.f32.partialorder %v39, %v49
    %v51 = vsel %vm50, %v47, 128
    %v52 = vand.u32 %v51, 65535
    %v53 = vshra.s32 %v51, 16
    %v54 = vcvt.s32.f32 %v52
    %v55 = vcvt.s32.f32 %v53
    %56 = vmin.xlane.f32.xlu0 %v55
    %v57 = vpop.xlane.xlu0 %56
    %vm58 = vcmp.eq.f32.partialorder %v55, %v57
    %v59 = vsel %vm58, %v54, inf
    %60 = vmin.xlane.f32.xlu0 %v59
    %v61 = vpop.xlane.xlu0 %60
    %v62 = vcvt.f32.s32 %v61
    %v63 = vcvt.f32.s32 %v57
    %v64 = vshll.u32 %v63, 16
    %v65 = vadd.s32 %v64, %v62
    %v66 = vadd.f32 %v49, 0.0
    %vm67 = vcmp.eq.s32.totalorder %v47, %v65
    %v68 = vsel %vm67, inf, %v39
    %69 = vmin.xlane.f32.xlu0 %v68
    %v70 = vpop.xlane.xlu0 %69
    %vm71 = vcmp.eq.f32.partialorder %v68, %v70
    %v72 = vsel %vm71, %v47, 128
    %v73 = vand.u32 %v72, 65535
    %v74 = vshra.s32 %v72, 16
    %v75 = vcvt.s32.f32 %v73
    %v76 = vcvt.s32.f32 %v74
    %77 = vmin.xlane.f32.xlu0 %v76
    %v78 = vpop.xlane.xlu0 %77
    %vm79 = vcmp.eq.f32.partialorder %v76, %v78
    %v80 = vsel %vm79, %v75, inf
    %81 = vmin.xlane.f32.xlu0 %v80
    %v82 = vpop.xlane.xlu0 %81
    %v83 = vcvt.f32.s32 %v82
    %v84 = vcvt.f32.s32 %v78
    %v85 = vshll.u32 %v84, 16
    %v86 = vadd.s32 %v85, %v83
    %v87 = vadd.f32 %v66, %v70
    %vm88 = vcmp.eq.s32.totalorder %v47, %v86
    %v89 = vsel %vm88, inf, %v68
    %90 = vmin.xlane.f32.xlu0 %v89
    %v91 = vpop.xlane.xlu0 %90
    %vm92 = vcmp.eq.f32.partialorder %v89, %v91
    %v93 = vsel %vm92, %v47, 128
    %v94 = vand.u32 %v93, 65535
    %v95 = vshra.s32 %v93, 16
    %v96 = vcvt.s32.f32 %v94
    %v97 = vcvt.s32.f32 %v95
    %98 = vmin.xlane.f32.xlu0 %v97
    %v99 = vpop.xlane.xlu0 %98
    %vm100 = vcmp.eq.f32.partialorder %v97, %v99
    %v101 = vsel %vm100, %v96, inf
    %102 = vmin.xlane.f32.xlu0 %v101
    %v103 = vpop.xlane.xlu0 %102
    %v104 = vcvt.f32.s32 %v103
    %v105 = vcvt.f32.s32 %v99
    %v106 = vshll.u32 %v105, 16
    %v107 = vadd.s32 %v106, %v104
    %v108 = vadd.f32 %v87, %v91
    %vm109 = vcmp.eq.s32.totalorder %v47, %v107
    %v110 = vsel %vm109, inf, %v89
    %111 = vmin.xlane.f32.xlu0 %v110
    %v112 = vpop.xlane.xlu0 %111
    %v113 = vadd.f32 %v108, %v112
    %v114 = vsel %vm45, %v113, 0.0
    %vm115 = vcmask 7168
    %v116 = vsel %vm115, %v114, 0.0
    %117 = vadd.xlane.f32.xlu0 %v116
    %v118 = vpop.xlane.xlu0 %117
    %v119 = vrot.slane %v118, 4
    %v120 = vadd.f32 %v118, %v119
    %v121 = vrot.slane %v120, 2
    %v122 = vadd.f32 %v120, %v121
    %v123 = vrot.slane %v122, 1
    %v124 = vadd.f32 %v122, %v123
    %s125 = vtos %v124
    %v126 = vstv %s125
    %127 = vst [vmem:[#allocation7] sm:$0xff] %v126
    // Predicated region
    $region18: #{tpu_custom_call.1} parent=1 // pred_check
      _
    $region19: #{tpu_custom_call.1} parent=1 // pred_check_branch
      %129 = sbr.rel (0) target = $region21
    $region20: #{tpu_custom_call.1} parent=1 // pred_region
      %s131 = ssub.s32 128, 128
      %132 = vsyncadd [#allocation4], %s131
      %s134 = sshll.u32 [#allocation7], 4
      %s135 = int_to_ptr.vmem [resolvable:$true] %s134
      %137 = dma.vmem_to_hbm [thread:$0]  %s135, 128, %s2, [#allocation4]
    $region21: #{tpu_custom_call.1} parent=1 // pred_fallthru
      _
    // Predicated region
    $region22: #{tpu_custom_call.1} parent=1 // pred_check
      _
    $region23: #{tpu_custom_call.1} parent=1 // pred_check_branch
      %139 = sbr.rel (0) target = $region25
    $region24: #{tpu_custom_call.1} parent=1 // pred_region
      %140 = dma.done [#allocation4], 128
    $region25: #{tpu_custom_call.1} parent=1 // pred_fallthru
      _
    %141 = vsyncpa [#allocation3], 1
    %142 = vsyncpa [#allocation6], 1
    %143 = vsyncpa [#allocation4], 1

</llo_original>
